<compile_context>
chip_gen: v7x
topology: tpu7x:2x2x1
jax: 0.10.0
libtpu: 0.0.40
codegen_flags: <defaults>
</compile_context>

<pallas_src>
import math

import jax
import jax.numpy as jnp
from jax.experimental import pallas as pl
from jax.experimental.pallas import tpu as pltpu


_LANE = 128
_SUBLANE = 8
_VMEM_MARGIN = 2 * 1024 * 1024  # headroom for Mosaic internal scratch


def _round_up(n, m):
    return ((n + m - 1) // m) * m


def _lora_kernel(alpha_ref, x_ref, wa_ref, wb_ref, o_ref, h_ref):
    """One (batch-tile i, out-tile j) grid step."""
    j = pl.program_id(1)

    # h = alpha * (x @ W_a): computed once per batch tile (j == 0) and reused
    # for every output tile of that batch tile.  alpha is folded into the
    # small (tb, rank_p) intermediate (rank_p << out_dim -> fewer VPU muls).
    @pl.when(j == 0)
    def _():
        x = x_ref[...].astype(wa_ref.dtype)  # in-kernel cast: VPU filler
        h = jnp.dot(x, wa_ref[...], preferred_element_type=jnp.float32)
        h_ref[...] = alpha_ref[0] * h

    h = h_ref[...].astype(wb_ref.dtype)
    y = jnp.dot(h, wb_ref[...], preferred_element_type=jnp.float32)
    o_ref[...] = y.astype(o_ref.dtype)


def _vmem_capacity_bytes():
    try:
        return int(pltpu.get_tpu_info().vmem_capacity_bytes)
    except Exception:
        return 64 * 1024 * 1024  # conservative (v7x-sized) fallback


def lora_forward(x, w_a, w_b, alpha, *, block_b=512, block_n=2048,
                 compute_dtype=None, vmem_budget_bytes=None):
    """alpha * ((x @ w_a) @ w_b) as a batch/out-tiled Pallas TPU kernel."""
    B, in_dim = x.shape
    rank, out_dim = w_b.shape
    assert w_a.shape == (in_dim, rank)

    out_dtype = x.dtype
    # Only the tiny low-rank weights get a wrapper-side cast; casting x here
    # would be its own un-hidden HBM pass, so the x tile is cast in-kernel.
    if compute_dtype is not None:
        w_a = w_a.astype(compute_dtype)
        w_b = w_b.astype(compute_dtype)

    # Zero-pad rank to a lane-dense multiple of 128 (exact math; the low-rank
    # weights are tiny and padded once).  out_dim is NOT padded: the tail out
    # tile is written with masked stores, far cheaper than an extra HBM pass
    # to slice a padded result.
    rank_p = _round_up(rank, _LANE)
    if rank_p != rank:
        w_a = jnp.pad(w_a, ((0, 0), (0, rank_p - rank)))
        w_b = jnp.pad(w_b, ((0, rank_p - rank), (0, 0)))

    x_bytes = jnp.dtype(x.dtype).itemsize
    o_bytes = jnp.dtype(out_dtype).itemsize
    w_item = jnp.dtype(w_a.dtype).itemsize

    # Output tile width: full out_dim when it fits, else lane-aligned block_n.
    if out_dim <= block_n:
        tn = out_dim
    else:
        tn = max(_LANE, (block_n // _LANE) * _LANE)
    nj = pl.cdiv(out_dim, tn)
    wb_buffers = 1 if nj == 1 else None  # None -> default double buffering

    def footprint(tb):
        x_tile = 2 * tb * in_dim * x_bytes                 # double-buffered x
        y_tile = 2 * tb * tn * o_bytes                     # double-buffered y
        wa = in_dim * rank_p * w_item                      # single-buffered
        wb = (1 if nj == 1 else 2) * rank_p * tn * w_item
        h_scratch = tb * rank_p * 4                        # f32 scratch
        y_f32 = tb * tn * 4                                # pre-cast f32 result
        return x_tile + y_tile + wa + wb + h_scratch + y_f32 + _VMEM_MARGIN

    # Generation-aware VMEM budget / limit (v5e/v6e 128 MiB, v7x 64 MiB).
    vmem_cap = _vmem_capacity_bytes()
    vmem_limit = int(vmem_cap * 0.75)
    if vmem_budget_bytes is None:
        vmem_budget_bytes = int(vmem_cap * 0.60)
    vmem_budget_bytes = min(vmem_budget_bytes, vmem_limit)

    # Largest batch tile <= block_b that fits the VMEM budget, aligned to the
    # dtype's sublane packing (8 rows for f32, 16 for bf16).
    pack = _SUBLANE * max(1, 4 // x_bytes)
    tb = min(_round_up(block_b, pack), _round_up(B, pack))
    while tb > pack and footprint(tb) > vmem_budget_bytes:
        tb = max(pack, _round_up(tb // 2, pack))
    if tb >= B:
        if B >= 512:
            # Keep >= 2 batch tiles so both v7x TensorCores get work; each
            # half-tile stays >= 256 rows (still bandwidth-efficient).
            tb = _round_up(pl.cdiv(B, 2), pack)
        else:
            tb = B  # single full-extent batch tile is always legal

    grid = (pl.cdiv(B, tb), nj)
    alpha_arr = jnp.full((1,), alpha, dtype=jnp.float32)

    def run(explicit_buffering):
        def spec(shape, index_map, buffers=None):
            if explicit_buffering and buffers is not None:
                return pl.BlockSpec(shape, index_map,
                                    pipeline_mode=pl.Buffered(buffers))
            return pl.BlockSpec(shape, index_map)

        call = pl.pallas_call(
            _lora_kernel,
            out_shape=jax.ShapeDtypeStruct((B, out_dim), out_dtype),
            grid_spec=pltpu.PrefetchScalarGridSpec(
                num_scalar_prefetch=1,  # alpha lives in SMEM
                grid=grid,
                in_specs=[
                    # x: streamed once per batch tile (index constant over j).
                    spec((tb, in_dim), lambda i, j, a: (i, 0)),
                    # W_a: constant block index -> VMEM-resident, 1 buffer.
                    spec((in_dim, rank_p), lambda i, j, a: (0, 0), buffers=1),
                    # W_b: one (rank_p, tn) column tile per out tile j.
                    spec((rank_p, tn), lambda i, j, a: (0, j),
                         buffers=wb_buffers),
                ],
                out_specs=spec((tb, tn), lambda i, j, a: (i, j)),
                scratch_shapes=[pltpu.VMEM((tb, rank_p), jnp.float32)],
            ),
            compiler_params=pltpu.CompilerParams(
                # Batch tiles are independent -> "parallel" (v7x megacore);
                # the out-tile axis reuses the h scratch sequentially.
                dimension_semantics=("parallel", "arbitrary"),
                vmem_limit_bytes=vmem_limit,
            ),
        )
        return call(alpha_arr, x, w_a, w_b)

    try:
        return run(explicit_buffering=True)
    except Exception:
        # Fallback for jax versions that reject pipeline_mode / Buffered(1):
        # default double-buffering is correct, just uses a bit more VMEM.
        return run(explicit_buffering=False)


if __name__ == "__main__":
    # Small shapes consistent with the module forward: x of shape (batch, in_dim).
    batch, in_dim, rank, out_dim = 8, 32, 8, 64
    alpha = 4.0

    key = jax.random.PRNGKey(0)
    k_x, k_wa, k_wb, k_x2, k_wa2, k_wb2 = jax.random.split(key, 6)

    x = jax.random.normal(k_x, (batch, in_dim), dtype=jnp.float32)

    # Module __init__: W_a ~ randn(in_dim, rank) / sqrt(rank), W_b = zeros.
    w_a = jax.random.normal(k_wa, (in_dim, rank), dtype=jnp.float32) / math.sqrt(rank)
    w_b = jnp.zeros((rank, out_dim), dtype=jnp.float32)

    out = jax.block_until_ready(lora_forward(x, w_a, w_b, alpha))
    ref = alpha * ((x @ w_a) @ w_b)
    assert out.shape == (batch, out_dim)
    assert jnp.allclose(out, ref, atol=1e-5, rtol=1e-5)

    # W_b == 0 makes the init-state output identically zero, so also verify
    # the math with a non-zero W_b (same kernel, f32 path).
    w_b2 = jax.random.normal(k_wb, (rank, out_dim), dtype=jnp.float32)
    out2 = jax.block_until_ready(lora_forward(x, w_a, w_b2, alpha))
    ref2 = alpha * ((x @ w_a) @ w_b2)
    assert jnp.allclose(out2, ref2, atol=1e-4, rtol=1e-4)

    # Multi-tile path: partial last batch tile AND partial last out tile
    # (masked stores on the tail; no wrapper-side slicing pass).
    B3, in3, r3, out3 = 20, 48, 4, 160
    x3 = jax.random.normal(k_x2, (B3, in3), dtype=jnp.float32)
    w_a3 = jax.random.normal(k_wa2, (in3, r3), dtype=jnp.float32) / math.sqrt(r3)
    w_b3 = jax.random.normal(k_wb2, (r3, out3), dtype=jnp.float32)
    out_mt = jax.block_until_ready(
        lora_forward(x3, w_a3, w_b3, alpha, block_b=16, block_n=128))
    ref_mt = alpha * ((x3 @ w_a3) @ w_b3)
    assert out_mt.shape == (B3, out3)
    assert jnp.allclose(out_mt, ref_mt, atol=1e-4, rtol=1e-4)

    # bf16 weight-streaming path (bandwidth optimization on v5e): x stays f32
    # in HBM and is cast in-kernel; f32 accumulation in both dots; loose
    # tolerance for the bf16 rounding of W_a / W_b / h.
    out_bf16 = jax.block_until_ready(
        lora_forward(x, w_a, w_b2, alpha, compute_dtype=jnp.bfloat16))
    assert out_bf16.dtype == x.dtype
    assert jnp.allclose(out_bf16, ref2, atol=1.0, rtol=5e-2)

    # TODO(synk): for very large in_dim (>= ~8K) add a reduction grid axis over
    # in_dim chunks accumulating into the (tb, rank_p) f32 scratch.
    print("KERNEL_OK")
</pallas_src>

<mosaic_0001>
module attributes {stable_mosaic.version = 11 : i64} {
  func.func @_lora_kernel(%arg0: i32, %arg1: i32, %arg2: memref<1xf32, #tpu.memory_space<smem>>, %arg3: memref<8x32xf32, #tpu.memory_space<vmem>>, %arg4: memref<32x128xf32, #tpu.memory_space<vmem>>, %arg5: memref<128x64xf32, #tpu.memory_space<vmem>>, %arg6: memref<8x64xf32, #tpu.memory_space<vmem>>, %arg7: memref<8x128xf32, #tpu.memory_space<vmem>>) attributes {dimension_semantics = [#tpu.dimension_semantics<parallel>, #tpu.dimension_semantics<arbitrary>], iteration_bounds = array<i64: 1, 1>, scalar_prefetch = 1 : i64, scratch_operands = 1 : i64, tpu.core_type = #tpu.core_type<tc>, window_params = [{transform_indices = @transform_0, window_bounds = array<i64: 8, 32>}, {pipeline_mode = #tpu.pipeline_mode<synchronous>, transform_indices = @transform_1, window_bounds = array<i64: 32, 128>}, {pipeline_mode = #tpu.pipeline_mode<synchronous>, transform_indices = @transform_2, window_bounds = array<i64: 128, 64>}, {transform_indices = @transform_3, window_bounds = array<i64: 8, 64>}]} {
    %c0_i32 = arith.constant 0 : i32
    %0 = arith.cmpi eq, %arg1, %c0_i32 : i32
    %1 = arith.extui %0 : i1 to i32
    %c0_i32_0 = arith.constant 0 : i32
    %2 = arith.cmpi ne, %1, %c0_i32_0 : i32
    scf.if %2 {
      %c0_6 = arith.constant 0 : index
      %c0_7 = arith.constant 0 : index
      %7 = vector.load %arg3[%c0_6, %c0_7] : memref<8x32xf32, #tpu.memory_space<vmem>>, vector<8x32xf32>
      %c0_8 = arith.constant 0 : index
      %c0_9 = arith.constant 0 : index
      %8 = vector.load %arg4[%c0_8, %c0_9] : memref<32x128xf32, #tpu.memory_space<vmem>>, vector<32x128xf32>
      %cst_10 = arith.constant dense<0.000000e+00> : vector<8x128xf32>
      %9 = tpu.matmul %7, %8, %cst_10 {dimension_numbers = #tpu.dot_dimension_numbers<[1], [0], [0], [1], [0, 0, 1, 1], [], []>} : vector<8x32xf32>, vector<32x128xf32>, vector<8x128xf32> -> vector<8x128xf32>
      %c0_11 = arith.constant 0 : index
      %10 = memref.load %arg2[%c0_11] : memref<1xf32, #tpu.memory_space<smem>>
      %11 = vector.broadcast %10 : f32 to vector<8x128xf32>
      %12 = arith.mulf %11, %9 : vector<8x128xf32>
      %c0_12 = arith.constant 0 : index
      %c0_13 = arith.constant 0 : index
      %13 = vector.load %arg7[%c0_12, %c0_13] : memref<8x128xf32, #tpu.memory_space<vmem>>, vector<8x128xf32>
      tpu.vector_store %arg7[%c0_12, %c0_13], %12 {strides = array<i32>} : memref<8x128xf32, #tpu.memory_space<vmem>>, vector<8x128xf32>,
    } else {
    }
    %c0 = arith.constant 0 : index
    %c0_1 = arith.constant 0 : index
    %3 = vector.load %arg7[%c0, %c0_1] : memref<8x128xf32, #tpu.memory_space<vmem>>, vector<8x128xf32>
    %c0_2 = arith.constant 0 : index
    %c0_3 = arith.constant 0 : index
    %4 = vector.load %arg5[%c0_2, %c0_3] : memref<128x64xf32, #tpu.memory_space<vmem>>, vector<128x64xf32>
    %cst = arith.constant dense<0.000000e+00> : vector<8x64xf32>
    %5 = tpu.matmul %3, %4, %cst {dimension_numbers = #tpu.dot_dimension_numbers<[1], [0], [0], [1], [0, 0, 1, 1], [], []>} : vector<8x128xf32>, vector<128x64xf32>, vector<8x64xf32> -> vector<8x64xf32>
    %c0_4 = arith.constant 0 : index
    %c0_5 = arith.constant 0 : index
    %6 = vector.load %arg6[%c0_4, %c0_5] : memref<8x64xf32, #tpu.memory_space<vmem>>, vector<8x64xf32>
    tpu.vector_store %arg6[%c0_4, %c0_5], %5 {strides = array<i32>} : memref<8x64xf32, #tpu.memory_space<vmem>>, vector<8x64xf32>,
    return
  }
  func.func @transform_0(%arg0: i32, %arg1: i32, %arg2: memref<1xf32, #tpu.memory_space<smem>>) -> (i32, i32) {
    %c0_i32 = arith.constant 0 : i32
    %c0_i32_0 = arith.constant 0 : i32
    return %arg0, %c0_i32 : i32, i32
  }
  func.func @transform_1(%arg0: i32, %arg1: i32, %arg2: memref<1xf32, #tpu.memory_space<smem>>) -> (i32, i32) {
    %c0_i32 = arith.constant 0 : i32
    %c0_i32_0 = arith.constant 0 : i32
    %c0_i32_1 = arith.constant 0 : i32
    return %c0_i32, %c0_i32_0 : i32, i32
  }
  func.func @transform_2(%arg0: i32, %arg1: i32, %arg2: memref<1xf32, #tpu.memory_space<smem>>) -> (i32, i32) {
    %c0_i32 = arith.constant 0 : i32
    %c0_i32_0 = arith.constant 0 : i32
    return %c0_i32, %arg1 : i32, i32
  }
  func.func @transform_3(%arg0: i32, %arg1: i32, %arg2: memref<1xf32, #tpu.memory_space<smem>>) -> (i32, i32) {
    %c0_i32 = arith.constant 0 : i32
    return %arg0, %arg1 : i32, i32
  }
}

module attributes {stable_mosaic.version = 11 : i64} {
  func.func @_lora_kernel(%arg0: i32, %arg1: i32, %arg2: memref<1xf32, #tpu.memory_space<smem>>, %arg3: memref<8x32xf32, #tpu.memory_space<vmem>>, %arg4: memref<32x128xf32, #tpu.memory_space<vmem>>, %arg5: memref<128x64xf32, #tpu.memory_space<vmem>>, %arg6: memref<8x64xf32, #tpu.memory_space<vmem>>, %arg7: memref<8x128xf32, #tpu.memory_space<vmem>>) attributes {dimension_semantics = [#tpu.dimension_semantics<parallel>, #tpu.dimension_semantics<arbitrary>], iteration_bounds = array<i64: 1, 1>, scalar_prefetch = 1 : i64, scratch_operands = 1 : i64, tpu.core_type = #tpu.core_type<tc>, window_params = [{transform_indices = @transform_0, window_bounds = array<i64: 8, 32>}, {pipeline_mode = #tpu.pipeline_mode<synchronous>, transform_indices = @transform_1, window_bounds = array<i64: 32, 128>}, {transform_indices = @transform_2, window_bounds = array<i64: 128, 64>}, {transform_indices = @transform_3, window_bounds = array<i64: 8, 64>}]} {
    %c0_i32 = arith.constant 0 : i32
    %0 = arith.cmpi eq, %arg1, %c0_i32 : i32
    %1 = arith.extui %0 : i1 to i32
    %c0_i32_0 = arith.constant 0 : i32
    %2 = arith.cmpi ne, %1, %c0_i32_0 : i32
    scf.if %2 {
      %c0_6 = arith.constant 0 : index
      %c0_7 = arith.constant 0 : index
      %7 = vector.load %arg3[%c0_6, %c0_7] : memref<8x32xf32, #tpu.memory_space<vmem>>, vector<8x32xf32>
      %c0_8 = arith.constant 0 : index
      %c0_9 = arith.constant 0 : index
      %8 = vector.load %arg4[%c0_8, %c0_9] : memref<32x128xf32, #tpu.memory_space<vmem>>, vector<32x128xf32>
      %cst_10 = arith.constant dense<0.000000e+00> : vector<8x128xf32>
      %9 = tpu.matmul %7, %8, %cst_10 {dimension_numbers = #tpu.dot_dimension_numbers<[1], [0], [0], [1], [0, 0, 1, 1], [], []>} : vector<8x32xf32>, vector<32x128xf32>, vector<8x128xf32> -> vector<8x128xf32>
      %c0_11 = arith.constant 0 : index
      %10 = memref.load %arg2[%c0_11] : memref<1xf32, #tpu.memory_space<smem>>
      %11 = vector.broadcast %10 : f32 to vector<8x128xf32>
      %12 = arith.mulf %11, %9 : vector<8x128xf32>
      %c0_12 = arith.constant 0 : index
      %c0_13 = arith.constant 0 : index
      %13 = vector.load %arg7[%c0_12, %c0_13] : memref<8x128xf32, #tpu.memory_space<vmem>>, vector<8x128xf32>
      tpu.vector_store %arg7[%c0_12, %c0_13], %12 {strides = array<i32>} : memref<8x128xf32, #tpu.memory_space<vmem>>, vector<8x128xf32>,
    } else {
    }
    %c0 = arith.constant 0 : index
    %c0_1 = arith.constant 0 : index
    %3 = vector.load %arg7[%c0, %c0_1] : memref<8x128xf32, #tpu.memory_space<vmem>>, vector<8x128xf32>
    %c0_2 = arith.constant 0 : index
    %c0_3 = arith.constant 0 : index
    %4 = vector.load %arg5[%c0_2, %c0_3] : memref<128x64xf32, #tpu.memory_space<vmem>>, vector<128x64xf32>
    %cst = arith.constant dense<0.000000e+00> : vector<8x64xf32>
    %5 = tpu.matmul %3, %4, %cst {dimension_numbers = #tpu.dot_dimension_numbers<[1], [0], [0], [1], [0, 0, 1, 1], [], []>} : vector<8x128xf32>, vector<128x64xf32>, vector<8x64xf32> -> vector<8x64xf32>
    %c0_4 = arith.constant 0 : index
    %c0_5 = arith.constant 0 : index
    %6 = vector.load %arg6[%c0_4, %c0_5] : memref<8x64xf32, #tpu.memory_space<vmem>>, vector<8x64xf32>
    tpu.vector_store %arg6[%c0_4, %c0_5], %5 {strides = array<i32>} : memref<8x64xf32, #tpu.memory_space<vmem>>, vector<8x64xf32>,
    return
  }
  func.func @transform_0(%arg0: i32, %arg1: i32, %arg2: memref<1xf32, #tpu.memory_space<smem>>) -> (i32, i32) {
    %c0_i32 = arith.constant 0 : i32
    %c0_i32_0 = arith.constant 0 : i32
    return %arg0, %c0_i32 : i32, i32
  }
  func.func @transform_1(%arg0: i32, %arg1: i32, %arg2: memref<1xf32, #tpu.memory_space<smem>>) -> (i32, i32) {
    %c0_i32 = arith.constant 0 : i32
    %c0_i32_0 = arith.constant 0 : i32
    %c0_i32_1 = arith.constant 0 : i32
    return %c0_i32, %c0_i32_0 : i32, i32
  }
  func.func @transform_2(%arg0: i32, %arg1: i32, %arg2: memref<1xf32, #tpu.memory_space<smem>>) -> (i32, i32) {
    %c0_i32 = arith.constant 0 : i32
    %c0_i32_0 = arith.constant 0 : i32
    return %c0_i32, %arg1 : i32, i32
  }
  func.func @transform_3(%arg0: i32, %arg1: i32, %arg2: memref<1xf32, #tpu.memory_space<smem>>) -> (i32, i32) {
    %c0_i32 = arith.constant 0 : i32
    return %arg0, %arg1 : i32, i32
  }
}

</mosaic_0001>

<llo_original>
// kernel: tpu_custom_call.1
$region0: #{tpu_custom_call.1}
  #allocation0 [shape = 'u32[]', space=smem, size = 0x4, offset = 0x4, fixed_abs, tag = 'smem constant byte address 0x4 - core index']
  #allocation1 [shape = 'u32[144,128]{1,0:T(1,128)}', space=vmem, size = 0x12000, scoped, tag = 'internal scratch']
  #allocation2 [shape = 'f32[8,128]{1,0:T(8,128)}', space=vmem, size = 0x1000, scoped, tag = 'scratch operand']
  #allocation3 [shape = 's32[1]{0}', space=sflag, size = 0x4, scoped, tag = 'scoped memory for tpu_custom_call.1']
  #allocation4 [shape = 'f32[1]{0:T(128)S(6)}', space=smem, size = 0x200, scoped, tag = 'prefetched SMEM operand 0']
  %s0 = inlined_call_operand.<no memory space> [shape: f32[1], index: 0, kind: input, shape index: {}]
  %s1 = inlined_call_operand.vmem [shape: f32[8,32], index: 1, kind: input, shape index: {}]
  %s2 = inlined_call_operand.vmem [shape: f32[32,128], index: 2, kind: input, shape index: {}]
  %s3 = inlined_call_operand.vmem [shape: f32[128,64], index: 3, kind: input, shape index: {}]
  %s4 = inlined_call_operand.hbm [shape: f32[8,64], index: 4, kind: output, shape index: {}]
  %s5 = sld [smem:[#allocation0]]
  $region26: #{tpu_custom_call.1} parent=0
    _
  %s7 = ssub.s32 1, %s5
  %s8 = scalar_select 0, %s7, %s5
  %9 = sst [smem:[#allocation4]] %s0
  $region1: #{tpu_custom_call.1} parent=0
    #allocation5 [shape = 'u8[4096]{0}', space=vmem, size = 0x1000, scoped, tag = 'output window, operand 0, single buffered']
    #allocation6 [shape = 's32[1]{0}', space=sflag, size = 0x4, scoped, tag = 'scoped memory for tpu_custom_call.1']
    %10 = vsyncpa [#allocation6], 0
    // Predicated region
    $region2: #{tpu_custom_call.1} parent=1 // pred_check
      _
    $region3: #{tpu_custom_call.1} parent=1 // pred_check_branch
      %12 = sbr.rel (0) target = $region5
    $region4: #{tpu_custom_call.1} parent=1 // pred_region
      _
    $region5: #{tpu_custom_call.1} parent=1 // pred_fallthru
      _
    // Predicated region
    $region6: #{tpu_custom_call.1} parent=1 // pred_check
      _
    $region7: #{tpu_custom_call.1} parent=1 // pred_check_branch
      %14 = sbr.rel (0) target = $region9
    $region8: #{tpu_custom_call.1} parent=1 // pred_region
      _
    $region9: #{tpu_custom_call.1} parent=1 // pred_fallthru
      _
    // Predicated region
    $region10: #{tpu_custom_call.1} parent=1 // pred_check
      _
    $region11: #{tpu_custom_call.1} parent=1 // pred_check_branch
      %16 = sbr.rel (0) target = $region13
    $region12: #{tpu_custom_call.1} parent=1 // pred_region
      _
    $region13: #{tpu_custom_call.1} parent=1 // pred_fallthru
      _
    %p17 = scmp.eq.s32.totalorder 0, 0
    // Predicated region
    $region14: #{tpu_custom_call.1} parent=1 // pred_check
      %p18 = pneg %p17
    $region15: #{tpu_custom_call.1} parent=1 // pred_check_branch
      %20 = sbr.rel (%p18) target = $region17
    $region16: #{tpu_custom_call.1} parent=1 // pred_region
      %v21 = vld [vmem:[%s1] sm:$0xff]
      %v22 = vld [vmem:[%s2] sm:$0xff]
      %v23 = vld [vmem:[%s2 + $0x8] sm:$0xff]
      %v24 = vld [vmem:[%s2 + $0x10] sm:$0xff]
      %v25 = vld [vmem:[%s2 + $0x18] sm:$0xff]
      %vm26 = vcmask 261120
      %v28 = vsel %vm26, %v21, 0
      %30 = vmatprep.subr.mxu0 0.0
      %31 = vmatpush1.msra.mxu0 %v22
      %32 = vmatprep.subr.mxu0 0.0
      %33 = vmatpush1.msra.mxu0 %v23
      %34 = vmatprep.subr.mxu0 0.0
      %35 = vmatpush1.msra.mxu0 %v24
      %36 = vmatprep.subr.mxu0 0.0
      %37 = vmatpush1.msra.mxu0 %v25
      %38 = vmatprep.subr.mxu0 0.0
      %39 = vmatpush1.msra.mxu0 0.0
      %40 = vmatprep.subr.mxu0 0.0
      %41 = vmatpush1.msra.mxu0 0.0
      %42 = vmatprep.subr.mxu0 0.0
      %43 = vmatpush1.msra.mxu0 0.0
      %44 = vmatprep.subr.mxu0 0.0
      %45 = vmatpush1.msra.mxu0 0.0
      %46 = vmatprep.subr.mxu0 0.0
      %47 = vmatpush1.msra.mxu0 0.0
      %48 = vmatprep.subr.mxu0 0.0
      %49 = vmatpush1.msra.mxu0 0.0
      %50 = vmatprep.subr.mxu0 0.0
      %51 = vmatpush1.msra.mxu0 0.0
      %52 = vmatprep.subr.mxu0 0.0
      %53 = vmatpush1.msra.mxu0 0.0
      %54 = vmatprep.subr.mxu0 0.0
      %55 = vmatpush1.msra.mxu0 0.0
      %56 = vmatprep.subr.mxu0 0.0
      %57 = vmatpush1.msra.mxu0 0.0
      %58 = vmatprep.subr.mxu0 0.0
      %59 = vmatpush1.msra.mxu0 0.0
      %60 = vmatprep.subr.mxu0 0.0
      %61 = vmatpush1.msra.mxu0 0.0
      %62 = vmatprep.subr.mxu0 0.0
      %63 = vmatpush1.msra.mxu0 0.0
      %64 = vmatprep.subr.mxu0 0.0
      %65 = vmatpush1.msra.mxu0 0.0
      %66 = vmatprep.subr.mxu0 0.0
      %67 = vmatpush1.msra.mxu0 0.0
      %68 = vmatprep.subr.mxu0 0.0
      %69 = vmatpush1.msra.mxu0 0.0
      %70 = vmatprep.subr.mxu0 0.0
      %71 = vmatpush1.msra.mxu0 0.0
      %72 = vmatprep.subr.mxu0 0.0
      %73 = vmatpush1.msra.mxu0 0.0
      %74 = vmatprep.subr.mxu0 0.0
      %75 = vmatpush1.msra.mxu0 0.0
      %76 = vmatprep.subr.mxu0 0.0
      %77 = vmatpush1.msra.mxu0 0.0
      %78 = vmatprep.subr.mxu0 0.0
      %79 = vmatpush1.msra.mxu0 0.0
      %80 = vmatprep.subr.mxu0 0.0
      %81 = vmatpush1.msra.mxu0 0.0
      %82 = vmatprep.subr.mxu0 0.0
      %83 = vmatpush1.msra.mxu0 0.0
      %84 = vmatprep.subr.mxu0 0.0
      %85 = vmatpush1.msra.mxu0 0.0
      %86 = vmatprep.subr.mxu0 0.0
      %87 = vmatpush1.msra.mxu0 0.0
      %88 = vmatprep.subr.mxu0 0.0
      %89 = vmatpush1.msra.mxu0 0.0
      %90 = vmatprep.subr.mxu0 0.0
      %91 = vmatpush1.msra.mxu0 0.0
      %92 = vmatprep.subr.mxu0 0.0
      %93 = vmatpush1.msra.mxu0 0.0
      %94 = vmatprep.mubr.f32.mxu0 0.0
      %95 = vmatmul.mubr.f32.gmra.mrb[0].mxu0 %v28
      %v96 = vpop.f32.mrb[0].mxu0
      %v97 = vadd.f32 0.0, %v96
      %v98 = vpop.f32.mrb[0].mxu0
      %99 = vdwg.mxu0
      %s100 = sld [smem:[#allocation4]]
      %v101 = vstv %s100
      %v102 = vmul.f32 %v101, %v97
      %103 = vst [vmem:[#allocation2] sm:$0xff] %v102
    $region17: #{tpu_custom_call.1} parent=1 // pred_fallthru
      _
    %v104 = vld [vmem:[#allocation2] sm:$0xff]
    %v105 = vld [vmem:[%s3] sm:$0xff]
    %v106 = vld [vmem:[%s3 + $0x8] sm:$0xff]
    %v107 = vld [vmem:[%s3 + $0x10] sm:$0xff]
    %v108 = vld [vmem:[%s3 + $0x18] sm:$0xff]
    %v109 = vld [vmem:[%s3 + $0x20] sm:$0xff]
    %v110 = vld [vmem:[%s3 + $0x28] sm:$0xff]
    %v111 = vld [vmem:[%s3 + $0x30] sm:$0xff]
    %v112 = vld [vmem:[%s3 + $0x38] sm:$0xff]
    %v113 = vld [vmem:[%s3 + $0x40] sm:$0xff]
    %v114 = vld [vmem:[%s3 + $0x48] sm:$0xff]
    %v115 = vld [vmem:[%s3 + $0x50] sm:$0xff]
    %v116 = vld [vmem:[%s3 + $0x58] sm:$0xff]
    %v117 = vld [vmem:[%s3 + $0x60] sm:$0xff]
    %v118 = vld [vmem:[%s3 + $0x68] sm:$0xff]
    %v119 = vld [vmem:[%s3 + $0x70] sm:$0xff]
    %v120 = vld [vmem:[%s3 + $0x78] sm:$0xff]
    %121 = vmatprep.subr.mxu0 0.0
    %122 = vmatpush1.msra.mxu0 %v105
    %123 = vmatprep.subr.mxu0 0.0
    %124 = vmatpush1.msra.mxu0 %v106
    %125 = vmatprep.subr.mxu0 0.0
    %126 = vmatpush1.msra.mxu0 %v107
    %127 = vmatprep.subr.mxu0 0.0
    %128 = vmatpush1.msra.mxu0 %v108
    %129 = vmatprep.subr.mxu0 0.0
    %130 = vmatpush1.msra.mxu0 %v109
    %131 = vmatprep.subr.mxu0 0.0
    %132 = vmatpush1.msra.mxu0 %v110
    %133 = vmatprep.subr.mxu0 0.0
    %134 = vmatpush1.msra.mxu0 %v111
    %135 = vmatprep.subr.mxu0 0.0
    %136 = vmatpush1.msra.mxu0 %v112
    %137 = vmatprep.subr.mxu0 0.0
    %138 = vmatpush1.msra.mxu0 %v113
    %139 = vmatprep.subr.mxu0 0.0
    %140 = vmatpush1.msra.mxu0 %v114
    %141 = vmatprep.subr.mxu0 0.0
    %142 = vmatpush1.msra.mxu0 %v115
    %143 = vmatprep.subr.mxu0 0.0
    %144 = vmatpush1.msra.mxu0 %v116
    %145 = vmatprep.subr.mxu0 0.0
    %146 = vmatpush1.msra.mxu0 %v117
    %147 = vmatprep.subr.mxu0 0.0
    %148 = vmatpush1.msra.mxu0 %v118
    %149 = vmatprep.subr.mxu0 0.0
    %150 = vmatpush1.msra.mxu0 %v119
    %151 = vmatprep.subr.mxu0 0.0
    %152 = vmatpush1.msra.mxu0 %v120
    %153 = vmatprep.subr.mxu0 0.0
    %154 = vmatpush1.msra.mxu0 0.0
    %155 = vmatprep.subr.mxu0 0.0
    %156 = vmatpush1.msra.mxu0 0.0
    %157 = vmatprep.subr.mxu0 0.0
    %158 = vmatpush1.msra.mxu0 0.0
    %159 = vmatprep.subr.mxu0 0.0
    %160 = vmatpush1.msra.mxu0 0.0
    %161 = vmatprep.subr.mxu0 0.0
    %162 = vmatpush1.msra.mxu0 0.0
    %163 = vmatprep.subr.mxu0 0.0
    %164 = vmatpush1.msra.mxu0 0.0
    %165 = vmatprep.subr.mxu0 0.0
    %166 = vmatpush1.msra.mxu0 0.0
    %167 = vmatprep.subr.mxu0 0.0
    %168 = vmatpush1.msra.mxu0 0.0
    %169 = vmatprep.subr.mxu0 0.0
    %170 = vmatpush1.msra.mxu0 0.0
    %171 = vmatprep.subr.mxu0 0.0
    %172 = vmatpush1.msra.mxu0 0.0
    %173 = vmatprep.subr.mxu0 0.0
    %174 = vmatpush1.msra.mxu0 0.0
    %175 = vmatprep.subr.mxu0 0.0
    %176 = vmatpush1.msra.mxu0 0.0
    %177 = vmatprep.subr.mxu0 0.0
    %178 = vmatpush1.msra.mxu0 0.0
    %179 = vmatprep.subr.mxu0 0.0
    %180 = vmatpush1.msra.mxu0 0.0
    %181 = vmatprep.subr.mxu0 0.0
    %182 = vmatpush1.msra.mxu0 0.0
    %183 = vmatprep.subr.mxu0 0.0
    %184 = vmatpush1.msra.mxu0 0.0
    %185 = vmatprep.mubr.f32.mxu0 0.0
    %186 = vmatmul.mubr.f32.gmra.mrb[0].mxu0 %v104
    %v187 = vpop.f32.mrb[0].mxu0
    %v188 = vadd.f32 0.0, %v187
    %v189 = vpop.f32.mrb[0].mxu0
    %190 = vdwg.mxu0
    %vm191 = vcmask 523264
    %192 = vst.msk [vmem:[#allocation5] sm:$0xff] %vm191, %v188
    // Predicated region
    $region18: #{tpu_custom_call.1} parent=1 // pred_check
      _
    $region19: #{tpu_custom_call.1} parent=1 // pred_check_branch
      %194 = sbr.rel (0) target = $region21
    $region20: #{tpu_custom_call.1} parent=1 // pred_region
      %s196 = ssub.s32 128, 128
      %197 = vsyncadd [#allocation6], %s196
      %s199 = sshll.u32 [#allocation5], 4
      %s200 = int_to_ptr.vmem [resolvable:$true] %s199
      %202 = dma.vmem_to_hbm [thread:$0]  %s200, 128, %s4, [#allocation6]
    $region21: #{tpu_custom_call.1} parent=1 // pred_fallthru
      _
    // Predicated region
    $region22: #{tpu_custom_call.1} parent=1 // pred_check
      _
    $region23: #{tpu_custom_call.1} parent=1 // pred_check_branch
      %204 = sbr.rel (0) target = $region25
    $region24: #{tpu_custom_call.1} parent=1 // pred_region
      %205 = dma.done [#allocation6], 128
    $region25: #{tpu_custom_call.1} parent=1 // pred_fallthru
      _
    %206 = vsyncpa [#allocation6], 1

// kernel: tpu_custom_call.1
$region0: #{tpu_custom_call.1}
  #allocation0 [shape = 'u32[]', space=smem, size = 0x4, offset = 0x4, fixed_abs, tag = 'smem constant byte address 0x4 - core index']
  #allocation1 [shape = 'u32[144,128]{1,0:T(1,128)}', space=vmem, size = 0x12000, scoped, tag = 'internal scratch']
  #allocation2 [shape = 'f32[8,128]{1,0:T(8,128)}', space=vmem, size = 0x1000, scoped, tag = 'scratch operand']
  #allocation3 [shape = 's32[1]{0}', space=sflag, size = 0x4, scoped, tag = 'scoped memory for tpu_custom_call.1']
  #allocation4 [shape = 'f32[1]{0:T(128)S(6)}', space=smem, size = 0x200, scoped, tag = 'prefetched SMEM operand 0']
  %s0 = inlined_call_operand.<no memory space> [shape: f32[1], index: 0, kind: input, shape index: {}]
  %s1 = inlined_call_operand.vmem [shape: f32[8,32], index: 1, kind: input, shape index: {}]
  %s2 = inlined_call_operand.vmem [shape: f32[32,128], index: 2, kind: input, shape index: {}]
  %s3 = inlined_call_operand.vmem [shape: f32[128,64], index: 3, kind: input, shape index: {}]
  %s4 = inlined_call_operand.hbm [shape: f32[8,64], index: 4, kind: output, shape index: {}]
  %s5 = sld [smem:[#allocation0]]
  $region26: #{tpu_custom_call.1} parent=0
    _
  %s7 = ssub.s32 1, %s5
  %s8 = scalar_select 0, %s7, %s5
  %9 = sst [smem:[#allocation4]] %s0
  $region1: #{tpu_custom_call.1} parent=0
    #allocation5 [shape = 'u8[4096]{0}', space=vmem, size = 0x1000, scoped, tag = 'output window, operand 0, single buffered']
    #allocation6 [shape = 's32[1]{0}', space=sflag, size = 0x4, scoped, tag = 'scoped memory for tpu_custom_call.1']
    %10 = vsyncpa [#allocation6], 0
    // Predicated region
    $region2: #{tpu_custom_call.1} parent=1 // pred_check
      _
    $region3: #{tpu_custom_call.1} parent=1 // pred_check_branch
      %12 = sbr.rel (0) target = $region5
    $region4: #{tpu_custom_call.1} parent=1 // pred_region
      _
    $region5: #{tpu_custom_call.1} parent=1 // pred_fallthru
      _
    // Predicated region
    $region6: #{tpu_custom_call.1} parent=1 // pred_check
      _
    $region7: #{tpu_custom_call.1} parent=1 // pred_check_branch
      %14 = sbr.rel (0) target = $region9
    $region8: #{tpu_custom_call.1} parent=1 // pred_region
      _
    $region9: #{tpu_custom_call.1} parent=1 // pred_fallthru
      _
    // Predicated region
    $region10: #{tpu_custom_call.1} parent=1 // pred_check
      _
    $region11: #{tpu_custom_call.1} parent=1 // pred_check_branch
      %16 = sbr.rel (0) target = $region13
    $region12: #{tpu_custom_call.1} parent=1 // pred_region
      _
    $region13: #{tpu_custom_call.1} parent=1 // pred_fallthru
      _
    %p17 = scmp.eq.s32.totalorder 0, 0
    // Predicated region
    $region14: #{tpu_custom_call.1} parent=1 // pred_check
      %p18 = pneg %p17
    $region15: #{tpu_custom_call.1} parent=1 // pred_check_branch
      %20 = sbr.rel (%p18) target = $region17
    $region16: #{tpu_custom_call.1} parent=1 // pred_region
      %v21 = vld [vmem:[%s1] sm:$0xff]
      %v22 = vld [vmem:[%s2] sm:$0xff]
      %v23 = vld [vmem:[%s2 + $0x8] sm:$0xff]
      %v24 = vld [vmem:[%s2 + $0x10] sm:$0xff]
      %v25 = vld [vmem:[%s2 + $0x18] sm:$0xff]
      %vm26 = vcmask 261120
      %v28 = vsel %vm26, %v21, 0
      %30 = vmatprep.subr.mxu0 0.0
      %31 = vmatpush1.msra.mxu0 %v22
      %32 = vmatprep.subr.mxu0 0.0
      %33 = vmatpush1.msra.mxu0 %v23
      %34 = vmatprep.subr.mxu0 0.0
      %35 = vmatpush1.msra.mxu0 %v24
      %36 = vmatprep.subr.mxu0 0.0
      %37 = vmatpush1.msra.mxu0 %v25
      %38 = vmatprep.subr.mxu0 0.0
      %39 = vmatpush1.msra.mxu0 0.0
      %40 = vmatprep.subr.mxu0 0.0
      %41 = vmatpush1.msra.mxu0 0.0
      %42 = vmatprep.subr.mxu0 0.0
      %43 = vmatpush1.msra.mxu0 0.0
      %44 = vmatprep.subr.mxu0 0.0
      %45 = vmatpush1.msra.mxu0 0.0
      %46 = vmatprep.subr.mxu0 0.0
      %47 = vmatpush1.msra.mxu0 0.0
      %48 = vmatprep.subr.mxu0 0.0
      %49 = vmatpush1.msra.mxu0 0.0
      %50 = vmatprep.subr.mxu0 0.0
      %51 = vmatpush1.msra.mxu0 0.0
      %52 = vmatprep.subr.mxu0 0.0
      %53 = vmatpush1.msra.mxu0 0.0
      %54 = vmatprep.subr.mxu0 0.0
      %55 = vmatpush1.msra.mxu0 0.0
      %56 = vmatprep.subr.mxu0 0.0
      %57 = vmatpush1.msra.mxu0 0.0
      %58 = vmatprep.subr.mxu0 0.0
      %59 = vmatpush1.msra.mxu0 0.0
      %60 = vmatprep.subr.mxu0 0.0
      %61 = vmatpush1.msra.mxu0 0.0
      %62 = vmatprep.subr.mxu0 0.0
      %63 = vmatpush1.msra.mxu0 0.0
      %64 = vmatprep.subr.mxu0 0.0
      %65 = vmatpush1.msra.mxu0 0.0
      %66 = vmatprep.subr.mxu0 0.0
      %67 = vmatpush1.msra.mxu0 0.0
      %68 = vmatprep.subr.mxu0 0.0
      %69 = vmatpush1.msra.mxu0 0.0
      %70 = vmatprep.subr.mxu0 0.0
      %71 = vmatpush1.msra.mxu0 0.0
      %72 = vmatprep.subr.mxu0 0.0
      %73 = vmatpush1.msra.mxu0 0.0
      %74 = vmatprep.subr.mxu0 0.0
      %75 = vmatpush1.msra.mxu0 0.0
      %76 = vmatprep.subr.mxu0 0.0
      %77 = vmatpush1.msra.mxu0 0.0
      %78 = vmatprep.subr.mxu0 0.0
      %79 = vmatpush1.msra.mxu0 0.0
      %80 = vmatprep.subr.mxu0 0.0
      %81 = vmatpush1.msra.mxu0 0.0
      %82 = vmatprep.subr.mxu0 0.0
      %83 = vmatpush1.msra.mxu0 0.0
      %84 = vmatprep.subr.mxu0 0.0
      %85 = vmatpush1.msra.mxu0 0.0
      %86 = vmatprep.subr.mxu0 0.0
      %87 = vmatpush1.msra.mxu0 0.0
      %88 = vmatprep.subr.mxu0 0.0
      %89 = vmatpush1.msra.mxu0 0.0
      %90 = vmatprep.subr.mxu0 0.0
      %91 = vmatpush1.msra.mxu0 0.0
      %92 = vmatprep.subr.mxu0 0.0
      %93 = vmatpush1.msra.mxu0 0.0
      %94 = vmatprep.mubr.f32.mxu0 0.0
      %95 = vmatmul.mubr.f32.gmra.mrb[0].mxu0 %v28
      %v96 = vpop.f32.mrb[0].mxu0
      %v97 = vadd.f32 0.0, %v96
      %v98 = vpop.f32.mrb[0].mxu0
      %99 = vdwg.mxu0
      %s100 = sld [smem:[#allocation4]]
      %v101 = vstv %s100
      %v102 = vmul.f32 %v101, %v97
      %103 = vst [vmem:[#allocation2] sm:$0xff] %v102
    $region17: #{tpu_custom_call.1} parent=1 // pred_fallthru
      _
    %v104 = vld [vmem:[#allocation2] sm:$0xff]
    %v105 = vld [vmem:[%s3] sm:$0xff]
    %v106 = vld [vmem:[%s3 + $0x8] sm:$0xff]
    %v107 = vld [vmem:[%s3 + $0x10] sm:$0xff]
    %v108 = vld [vmem:[%s3 + $0x18] sm:$0xff]
    %v109 = vld [vmem:[%s3 + $0x20] sm:$0xff]
    %v110 = vld [vmem:[%s3 + $0x28] sm:$0xff]
    %v111 = vld [vmem:[%s3 + $0x30] sm:$0xff]
    %v112 = vld [vmem:[%s3 + $0x38] sm:$0xff]
    %v113 = vld [vmem:[%s3 + $0x40] sm:$0xff]
    %v114 = vld [vmem:[%s3 + $0x48] sm:$0xff]
    %v115 = vld [vmem:[%s3 + $0x50] sm:$0xff]
    %v116 = vld [vmem:[%s3 + $0x58] sm:$0xff]
    %v117 = vld [vmem:[%s3 + $0x60] sm:$0xff]
    %v118 = vld [vmem:[%s3 + $0x68] sm:$0xff]
    %v119 = vld [vmem:[%s3 + $0x70] sm:$0xff]
    %v120 = vld [vmem:[%s3 + $0x78] sm:$0xff]
    %121 = vmatprep.subr.mxu0 0.0
    %122 = vmatpush1.msra.mxu0 %v105
    %123 = vmatprep.subr.mxu0 0.0
    %124 = vmatpush1.msra.mxu0 %v106
    %125 = vmatprep.subr.mxu0 0.0
    %126 = vmatpush1.msra.mxu0 %v107
    %127 = vmatprep.subr.mxu0 0.0
    %128 = vmatpush1.msra.mxu0 %v108
    %129 = vmatprep.subr.mxu0 0.0
    %130 = vmatpush1.msra.mxu0 %v109
    %131 = vmatprep.subr.mxu0 0.0
    %132 = vmatpush1.msra.mxu0 %v110
    %133 = vmatprep.subr.mxu0 0.0
    %134 = vmatpush1.msra.mxu0 %v111
    %135 = vmatprep.subr.mxu0 0.0
    %136 = vmatpush1.msra.mxu0 %v112
    %137 = vmatprep.subr.mxu0 0.0
    %138 = vmatpush1.msra.mxu0 %v113
    %139 = vmatprep.subr.mxu0 0.0
    %140 = vmatpush1.msra.mxu0 %v114
    %141 = vmatprep.subr.mxu0 0.0
    %142 = vmatpush1.msra.mxu0 %v115
    %143 = vmatprep.subr.mxu0 0.0
    %144 = vmatpush1.msra.mxu0 %v116
    %145 = vmatprep.subr.mxu0 0.0
    %146 = vmatpush1.msra.mxu0 %v117
    %147 = vmatprep.subr.mxu0 0.0
    %148 = vmatpush1.msra.mxu0 %v118
    %149 = vmatprep.subr.mxu0 0.0
    %150 = vmatpush1.msra.mxu0 %v119
    %151 = vmatprep.subr.mxu0 0.0
    %152 = vmatpush1.msra.mxu0 %v120
    %153 = vmatprep.subr.mxu0 0.0
    %154 = vmatpush1.msra.mxu0 0.0
    %155 = vmatprep.subr.mxu0 0.0
    %156 = vmatpush1.msra.mxu0 0.0
    %157 = vmatprep.subr.mxu0 0.0
    %158 = vmatpush1.msra.mxu0 0.0
    %159 = vmatprep.subr.mxu0 0.0
    %160 = vmatpush1.msra.mxu0 0.0
    %161 = vmatprep.subr.mxu0 0.0
    %162 = vmatpush1.msra.mxu0 0.0
    %163 = vmatprep.subr.mxu0 0.0
    %164 = vmatpush1.msra.mxu0 0.0
    %165 = vmatprep.subr.mxu0 0.0
    %166 = vmatpush1.msra.mxu0 0.0
    %167 = vmatprep.subr.mxu0 0.0
    %168 = vmatpush1.msra.mxu0 0.0
    %169 = vmatprep.subr.mxu0 0.0
    %170 = vmatpush1.msra.mxu0 0.0
    %171 = vmatprep.subr.mxu0 0.0
    %172 = vmatpush1.msra.mxu0 0.0
    %173 = vmatprep.subr.mxu0 0.0
    %174 = vmatpush1.msra.mxu0 0.0
    %175 = vmatprep.subr.mxu0 0.0
    %176 = vmatpush1.msra.mxu0 0.0
    %177 = vmatprep.subr.mxu0 0.0
    %178 = vmatpush1.msra.mxu0 0.0
    %179 = vmatprep.subr.mxu0 0.0
    %180 = vmatpush1.msra.mxu0 0.0
    %181 = vmatprep.subr.mxu0 0.0
    %182 = vmatpush1.msra.mxu0 0.0
    %183 = vmatprep.subr.mxu0 0.0
    %184 = vmatpush1.msra.mxu0 0.0
    %185 = vmatprep.mubr.f32.mxu0 0.0
    %186 = vmatmul.mubr.f32.gmra.mrb[0].mxu0 %v104
    %v187 = vpop.f32.mrb[0].mxu0
    %v188 = vadd.f32 0.0, %v187
    %v189 = vpop.f32.mrb[0].mxu0
    %190 = vdwg.mxu0
    %vm191 = vcmask 523264
    %192 = vst.msk [vmem:[#allocation5] sm:$0xff] %vm191, %v188
    // Predicated region
    $region18: #{tpu_custom_call.1} parent=1 // pred_check
      _
    $region19: #{tpu_custom_call.1} parent=1 // pred_check_branch
      %194 = sbr.rel (0) target = $region21
    $region20: #{tpu_custom_call.1} parent=1 // pred_region
      %s196 = ssub.s32 128, 128
      %197 = vsyncadd [#allocation6], %s196
      %s199 = sshll.u32 [#allocation5], 4
      %s200 = int_to_ptr.vmem [resolvable:$true] %s199
      %202 = dma.vmem_to_hbm [thread:$0]  %s200, 128, %s4, [#allocation6]
    $region21: #{tpu_custom_call.1} parent=1 // pred_fallthru
      _
    // Predicated region
    $region22: #{tpu_custom_call.1} parent=1 // pred_check
      _
    $region23: #{tpu_custom_call.1} parent=1 // pred_check_branch
      %204 = sbr.rel (0) target = $region25
    $region24: #{tpu_custom_call.1} parent=1 // pred_region
      %205 = dma.done [#allocation6], 128
    $region25: #{tpu_custom_call.1} parent=1 // pred_fallthru
      _
    %206 = vsyncpa [#allocation6], 1

</llo_original>
